<compile_context>
chip_gen: v5e
topology: v5e:2x2
jax: 0.10.0
libtpu: 0.0.40
codegen_flags: <defaults>
</compile_context>

<pallas_src>
import functools

import numpy as np

import jax
import jax.numpy as jnp
from jax import lax
from jax.experimental import pallas as pl
from jax.experimental.pallas import tpu as pltpu


# ---------------------------------------------------------------------------
# Fused kernel: one grid step == `NB` images, layout (NB, C, H*W)
# ---------------------------------------------------------------------------
def _fused_kernel(x_ref, w1_ref, w2_ref, w3_ref, bias_ref, bmask_ref, o_ref,
                  *, W):
    NB = x_ref.shape[0]
    HW = x_ref.shape[2]
    C1 = w1_ref.shape[0]
    C2 = w2_ref.shape[1]
    Cout = w3_ref.shape[0]

    w1 = w1_ref[...]
    w3 = w3_ref[...]
    bias = bias_ref[...]
    b1 = bias[:C1, 0:1]           # (C1, 1) -> broadcasts along lanes
    b2 = bias[:C2, 1:2]
    b3 = bias[:Cout, 2:3]

    for b in range(NB):
        x2d = x_ref[b]            # (Cin, HW); also the residual (downsample=None)

        # conv1 (1x1): channel_selection, mask_channel1, bn1 scale folded in w1.
        h1 = jnp.dot(w1, x2d, preferred_element_type=jnp.float32)
        h1 = jnp.maximum(h1 + b1, 0.0)

        # conv2 (3x3, pad=1, stride=1): 9 accumulating MXU passes over
        # roll-shifted copies of h1, with precomputed 0/1 border masks.
        h2 = jnp.zeros((C2, HW), jnp.float32)
        k = 0
        for dy in (-1, 0, 1):
            for dx in (-1, 0, 1):
                s = dy * W + dx
                if s == 0:
                    win = h1
                else:
                    # win[:, p] = h1[:, p + s] (wrapped lanes zeroed by the mask)
                    win = pltpu.roll(h1, shift=(-s) % HW, axis=1)
                    win = win * bmask_ref[k:k + 1, :]
                h2 = h2 + jnp.dot(w2_ref[k], win,
                                  preferred_element_type=jnp.float32)
                k += 1
        h2 = jnp.maximum(h2 + b2, 0.0)

        # conv3 (1x1): mask_channel3, bn3 scale, scalar Mask folded in w3/b3.
        h3 = jnp.dot(w3, h2, preferred_element_type=jnp.float32) + b3
        o_ref[b] = jnp.maximum(h3 + x2d, 0.0)     # Cin == Cout (asserted outside)


# ---------------------------------------------------------------------------
# Wrapper
# ---------------------------------------------------------------------------
def _border_masks(H, W):
    """(9, H*W) 0/1 float mask; row k=(dy+1)*3+(dx+1) marks valid source pixels."""
    yy, xx = np.mgrid[0:H, 0:W]
    rows = []
    for dy in (-1, 0, 1):
        for dx in (-1, 0, 1):
            valid = ((yy + dy >= 0) & (yy + dy < H)
                     & (xx + dx >= 0) & (xx + dx < W))
            rows.append(valid.reshape(-1))
    return jnp.asarray(np.stack(rows), dtype=jnp.float32)


def multi_sparse_res_bottleneck(x_nchw, kp, *, images_per_step=1):
    """Forward pass (stride=1, downsample=None => inplanes == planes*4).

    images_per_step: keep >=2 grid steps on v7x (2 TensorCores); set to N on
    single-TC v5e/v6e to amortize per-step pipeline overhead.
    """
    N, Cin, H, W = x_nchw.shape
    Cout = kp["w3f"].shape[0]
    assert Cin == Cout, "stride=1 / downsample=None requires inplanes == planes*4"
    NB = images_per_step
    assert N % NB == 0, "images_per_step must divide the batch"
    HW = H * W

    x = x_nchw.reshape(N, Cin, HW).astype(jnp.float32)   # free reshape, no transpose
    bmask = _border_masks(H, W)

    out = pl.pallas_call(
        functools.partial(_fused_kernel, W=W),
        out_shape=jax.ShapeDtypeStruct((N, Cout, HW), jnp.float32),
        grid_spec=pltpu.PrefetchScalarGridSpec(
            num_scalar_prefetch=0,
            grid=(N // NB,),
            in_specs=[
                pl.BlockSpec((NB, Cin, HW), lambda n: (n, 0, 0)),
                pl.BlockSpec(kp["w1f"].shape, lambda n: (0, 0)),
                pl.BlockSpec(kp["w2p"].shape, lambda n: (0, 0, 0)),
                pl.BlockSpec(kp["w3f"].shape, lambda n: (0, 0)),
                pl.BlockSpec(kp["bias_pack"].shape, lambda n: (0, 0)),
                pl.BlockSpec(bmask.shape, lambda n: (0, 0)),
            ],
            out_specs=pl.BlockSpec((NB, Cout, HW), lambda n: (n, 0, 0)),
        ),
        compiler_params=pltpu.CompilerParams(
            dimension_semantics=("parallel",)),
    )(x, kp["w1f"], kp["w2p"], kp["w3f"], kp["bias_pack"], bmask)

    return out.reshape(N, Cout, H, W)                     # free reshape back


# ---------------------------------------------------------------------------
# Parameter folding (one-time, tiny) + pure-JAX reference for correctness
# ---------------------------------------------------------------------------
def _fold_bn(gamma, beta, mean, var, eps=1e-5):
    scale = gamma / jnp.sqrt(var + eps)
    bias = beta - mean * scale
    return scale, bias


def prepare_kernel_params(raw):
    """Fold channel_selection, per-channel masks, eval-mode BN and the scalar
    Mask into transposed conv weights so the kernel only does matmul+bias+relu."""
    Cin = raw["inplanes"]
    index = np.asarray(raw["index"])
    assert len(np.unique(index)) == len(index), "channel_selection indices must be unique"
    w1, w2, w3 = raw["w1"], raw["w2"], raw["w3"]          # PyTorch OIHW
    C1 = w1.shape[0]
    C2 = w2.shape[0]
    Cout = w3.shape[0]
    assert w1.shape[1] == len(index)
    # channel_selection is a no-op when it selects all channels (PyTorch branch).
    if len(index) == Cin:
        index = np.arange(Cin)

    s1, b1 = _fold_bn(raw["g1"], raw["beta1"], raw["rm1"], raw["rv1"])
    s2, b2 = _fold_bn(raw["g2"], raw["beta2"], raw["rm2"], raw["rv2"])
    s3, b3 = _fold_bn(raw["g3"], raw["beta3"], raw["rm3"], raw["rv3"])
    msk = raw["mask"][0]

    # conv1 as (C1, Cin): zero columns for unselected channels; input columns
    # scaled by mask_channel1, output rows by bn1 scale.
    w1f = jnp.zeros((C1, Cin), jnp.float32)
    w1f = w1f.at[:, index].set(w1[:, :, 0, 0] * raw["m1"][None, :])
    w1f = w1f * s1[:, None]

    # conv2 as (9, C2, C1): window k = (ky*3 + kx), matching the kernel's
    # (dy, dx) loop order; input cols scaled by mask_channel2, rows by bn2.
    w2p = (jnp.transpose(w2, (2, 3, 0, 1))
           * raw["m2"][None, None, None, :]
           * s2[None, None, :, None]).reshape(9, C2, w2.shape[1])

    # conv3 as (Cout, C2): cols scaled by mask_channel3, rows by bn3 * scalar Mask.
    w3f = w3[:, :, 0, 0] * raw["m3"][None, :] * (s3 * msk)[:, None]

    # Biases packed as columns of one small operand (col0: b1, col1: b2, col2: b3*mask).
    Cmax = max(C1, C2, Cout)
    bias_pack = jnp.zeros((Cmax, 3), jnp.float32)
    bias_pack = bias_pack.at[:C1, 0].set(b1)
    bias_pack = bias_pack.at[:C2, 1].set(b2)
    bias_pack = bias_pack.at[:Cout, 2].set(b3 * msk)

    return dict(w1f=w1f, w2p=w2p, w3f=w3f, bias_pack=bias_pack)


def _ref_forward(x_nchw, raw):
    """Pure-JAX reference of the PyTorch forward (eval-mode BN), unfolded params."""
    dn = ("NHWC", "HWIO", "NHWC")
    s1, b1 = _fold_bn(raw["g1"], raw["beta1"], raw["rm1"], raw["rv1"])
    s2, b2 = _fold_bn(raw["g2"], raw["beta2"], raw["rm2"], raw["rv2"])
    s3, b3 = _fold_bn(raw["g3"], raw["beta3"], raw["rm3"], raw["rv3"])
    w1_hwio = jnp.transpose(raw["w1"], (2, 3, 1, 0))
    w2_hwio = jnp.transpose(raw["w2"], (2, 3, 1, 0))
    w3_hwio = jnp.transpose(raw["w3"], (2, 3, 1, 0))

    x = jnp.transpose(x_nchw, (0, 2, 3, 1)).astype(jnp.float32)
    residual = x
    if raw["index"].shape[0] == x.shape[-1]:
        out = x
    else:
        out = x[:, :, :, raw["index"]]
    out = out * raw["m1"]
    out = lax.conv_general_dilated(out, w1_hwio, (1, 1), "SAME", dimension_numbers=dn)
    out = jnp.maximum(out * s1 + b1, 0.0)
    out = out * raw["m2"]
    out = lax.conv_general_dilated(out, w2_hwio, (1, 1), "SAME", dimension_numbers=dn)
    out = jnp.maximum(out * s2 + b2, 0.0)
    out = out * raw["m3"]
    out = lax.conv_general_dilated(out, w3_hwio, (1, 1), "SAME", dimension_numbers=dn)
    out = out * s3 + b3
    out = out * raw["mask"][0]
    out = jnp.maximum(out + residual, 0.0)
    return jnp.transpose(out, (0, 3, 1, 2))


if __name__ == "__main__":
    # Module configuration (shapes consistent with __init__).
    N, Hs, Ws = 2, 16, 16
    inplanes, planes, expansion = 16, 4, 4
    cfg = (8, 8, 8)
    Cout = planes * expansion            # 16 == inplanes (stride=1, downsample=None)
    index = jnp.arange(0, inplanes, 2)   # channel_selection picks cfg[0]=8 channels
    norm_mean, norm_var = 1.0, 0.1

    ks = jax.random.split(jax.random.PRNGKey(0), 24)
    nrm = lambda k, s: jax.random.normal(k, s, jnp.float32)

    # Conv weights (PyTorch OIHW), deterministic init.
    w1 = 0.1 * nrm(ks[0], (cfg[1], cfg[0], 1, 1))
    w2 = 0.1 * nrm(ks[1], (cfg[2], cfg[1], 3, 3))
    w3 = 0.1 * nrm(ks[2], (Cout, cfg[2], 1, 1))

    # BatchNorm (eval-mode) parameters.
    def bn(kg, kb, km, kv, c):
        g = 1.0 + 0.1 * nrm(kg, (c,))
        b = 0.1 * nrm(kb, (c,))
        m = 0.1 * nrm(km, (c,))
        v = 0.5 + jnp.abs(nrm(kv, (c,))) * 0.1
        return g, b, m, v

    g1, be1, rm1, rv1 = bn(ks[3], ks[4], ks[5], ks[6], cfg[1])
    g2, be2, rm2, rv2 = bn(ks[7], ks[8], ks[9], ks[10], cfg[2])
    g3, be3, rm3, rv3 = bn(ks[11], ks[12], ks[13], ks[14], Cout)

    # Mask parameters ~ Normal(norm_mean, norm_var) as in __init__.
    mask_scalar = norm_mean + norm_var * nrm(ks[15], (1,))
    m1 = norm_mean + norm_var * nrm(ks[16], (cfg[0],))
    m2 = norm_mean + norm_var * nrm(ks[17], (cfg[1],))
    m3 = norm_mean + norm_var * nrm(ks[18], (cfg[2],))

    raw = dict(inplanes=inplanes, index=index,
               w1=w1, w2=w2, w3=w3,
               g1=g1, beta1=be1, rm1=rm1, rv1=rv1,
               g2=g2, beta2=be2, rm2=rm2, rv2=rv2,
               g3=g3, beta3=be3, rm3=rm3, rv3=rv3,
               m1=m1, m2=m2, m3=m3, mask=mask_scalar)

    kp = prepare_kernel_params(raw)

    x = jax.random.normal(ks[19], (N, inplanes, Hs, Ws), jnp.float32)  # NCHW input

    ref = jax.block_until_ready(_ref_forward(x, raw))

    # Default: 1 image / step -> 2 "parallel" grid steps (both v7x TensorCores).
    out = jax.block_until_ready(multi_sparse_res_bottleneck(x, kp))
    assert out.shape == (N, Cout, Hs, Ws)
    max_err = jnp.max(jnp.abs(out - ref))
    assert jnp.allclose(out, ref, rtol=1e-4, atol=1e-4), f"max abs err {max_err}"

    # Batched variant: whole batch in one step (single-TC v5e/v6e amortization).
    out_b = jax.block_until_ready(
        multi_sparse_res_bottleneck(x, kp, images_per_step=N))
    max_err_b = jnp.max(jnp.abs(out_b - ref))
    assert jnp.allclose(out_b, ref, rtol=1e-4, atol=1e-4), f"max abs err {max_err_b}"

    print("KERNEL_OK")
</pallas_src>

<mosaic_0001>
module attributes {stable_mosaic.version = 11 : i64} {
  func.func @_fused_kernel(%arg0: i32, %arg1: memref<1x16x256xf32, #tpu.memory_space<vmem>>, %arg2: memref<8x16xf32, #tpu.memory_space<vmem>>, %arg3: memref<9x8x8xf32, #tpu.memory_space<vmem>>, %arg4: memref<16x8xf32, #tpu.memory_space<vmem>>, %arg5: memref<16x3xf32, #tpu.memory_space<vmem>>, %arg6: memref<9x256xf32, #tpu.memory_space<vmem>>, %arg7: memref<1x16x256xf32, #tpu.memory_space<vmem>>) attributes {dimension_semantics = [#tpu.dimension_semantics<parallel>], iteration_bounds = array<i64: 2>, scalar_prefetch = 0 : i64, scratch_operands = 0 : i64, tpu.core_type = #tpu.core_type<tc>, window_params = [{transform_indices = @transform_0, window_bounds = array<i64: 1, 16, 256>}, {pipeline_mode = #tpu.pipeline_mode<synchronous>, transform_indices = @transform_1, window_bounds = array<i64: 8, 16>}, {pipeline_mode = #tpu.pipeline_mode<synchronous>, transform_indices = @transform_2, window_bounds = array<i64: 9, 8, 8>}, {pipeline_mode = #tpu.pipeline_mode<synchronous>, transform_indices = @transform_3, window_bounds = array<i64: 16, 8>}, {pipeline_mode = #tpu.pipeline_mode<synchronous>, transform_indices = @transform_4, window_bounds = array<i64: 16, 3>}, {pipeline_mode = #tpu.pipeline_mode<synchronous>, transform_indices = @transform_5, window_bounds = array<i64: 9, 256>}, {transform_indices = @transform_6, window_bounds = array<i64: 1, 16, 256>}]} {
    %c0 = arith.constant 0 : index
    %c0_0 = arith.constant 0 : index
    %0 = vector.load %arg2[%c0, %c0_0] : memref<8x16xf32, #tpu.memory_space<vmem>>, vector<8x16xf32>
    %c0_1 = arith.constant 0 : index
    %c0_2 = arith.constant 0 : index
    %1 = vector.load %arg4[%c0_1, %c0_2] : memref<16x8xf32, #tpu.memory_space<vmem>>, vector<16x8xf32>
    %c0_3 = arith.constant 0 : index
    %c0_4 = arith.constant 0 : index
    %2 = vector.load %arg5[%c0_3, %c0_4] : memref<16x3xf32, #tpu.memory_space<vmem>>, vector<16x3xf32>
    %3 = vector.extract_strided_slice %2 {offsets = [0, 0], sizes = [8, 1], strides = [1, 1]} : vector<16x3xf32> to vector<8x1xf32>
    %4 = vector.extract_strided_slice %2 {offsets = [0, 1], sizes = [8, 1], strides = [1, 1]} : vector<16x3xf32> to vector<8x1xf32>
    %5 = vector.extract_strided_slice %2 {offsets = [0, 2], sizes = [16, 1], strides = [1, 1]} : vector<16x3xf32> to vector<16x1xf32>
    %c0_5 = arith.constant 0 : index
    %c0_6 = arith.constant 0 : index
    %c0_7 = arith.constant 0 : index
    %6 = vector.load %arg1[%c0_5, %c0_6, %c0_7] : memref<1x16x256xf32, #tpu.memory_space<vmem>>, vector<1x16x256xf32>
    %7 = vector.shape_cast %6 : vector<1x16x256xf32> to vector<16x256xf32>
    %cst = arith.constant dense<0.000000e+00> : vector<8x256xf32>
    %8 = tpu.matmul %0, %7, %cst {dimension_numbers = #tpu.dot_dimension_numbers<[1], [0], [0], [1], [0, 0, 1, 1], [], []>} : vector<8x16xf32>, vector<16x256xf32>, vector<8x256xf32> -> vector<8x256xf32>
    %9 = vector.broadcast %3 : vector<8x1xf32> to vector<8x256xf32>
    %10 = arith.addf %8, %9 : vector<8x256xf32>
    %cst_8 = arith.constant 0.000000e+00 : f32
    %11 = vector.broadcast %cst_8 : f32 to vector<8x256xf32>
    %12 = arith.maximumf %10, %11 : vector<8x256xf32>
    %cst_9 = arith.constant 0.000000e+00 : f32
    %13 = vector.broadcast %cst_9 : f32 to vector<8x256xf32>
    %c17_i32 = arith.constant 17 : i32
    %14 = tpu.dynamic_rotate %12 by %c17_i32 dim 1 : vector<8x256xf32>, i32 -> vector<8x256xf32>
    %c0_10 = arith.constant 0 : index
    %c0_11 = arith.constant 0 : index
    %15 = vector.load %arg6[%c0_10, %c0_11] : memref<9x256xf32, #tpu.memory_space<vmem>>, vector<1x256xf32>
    %16 = vector.broadcast %15 : vector<1x256xf32> to vector<8x256xf32>
    %17 = arith.mulf %14, %16 : vector<8x256xf32>
    %c0_12 = arith.constant 0 : index
    %c0_13 = arith.constant 0 : index
    %c0_14 = arith.constant 0 : index
    %18 = vector.load %arg3[%c0_12, %c0_13, %c0_14] : memref<9x8x8xf32, #tpu.memory_space<vmem>>, vector<1x8x8xf32>
    %19 = vector.shape_cast %18 : vector<1x8x8xf32> to vector<8x8xf32>
    %cst_15 = arith.constant dense<0.000000e+00> : vector<8x256xf32>
    %20 = tpu.matmul %19, %17, %cst_15 {dimension_numbers = #tpu.dot_dimension_numbers<[1], [0], [0], [1], [0, 0, 1, 1], [], []>} : vector<8x8xf32>, vector<8x256xf32>, vector<8x256xf32> -> vector<8x256xf32>
    %21 = arith.addf %13, %20 : vector<8x256xf32>
    %c16_i32 = arith.constant 16 : i32
    %22 = tpu.dynamic_rotate %12 by %c16_i32 dim 1 : vector<8x256xf32>, i32 -> vector<8x256xf32>
    %c1 = arith.constant 1 : index
    %c0_16 = arith.constant 0 : index
    %23 = vector.load %arg6[%c1, %c0_16] : memref<9x256xf32, #tpu.memory_space<vmem>>, vector<1x256xf32>
    %24 = vector.broadcast %23 : vector<1x256xf32> to vector<8x256xf32>
    %25 = arith.mulf %22, %24 : vector<8x256xf32>
    %c1_17 = arith.constant 1 : index
    %c0_18 = arith.constant 0 : index
    %c0_19 = arith.constant 0 : index
    %26 = vector.load %arg3[%c1_17, %c0_18, %c0_19] : memref<9x8x8xf32, #tpu.memory_space<vmem>>, vector<1x8x8xf32>
    %27 = vector.shape_cast %26 : vector<1x8x8xf32> to vector<8x8xf32>
    %cst_20 = arith.constant dense<0.000000e+00> : vector<8x256xf32>
    %28 = tpu.matmul %27, %25, %cst_20 {dimension_numbers = #tpu.dot_dimension_numbers<[1], [0], [0], [1], [0, 0, 1, 1], [], []>} : vector<8x8xf32>, vector<8x256xf32>, vector<8x256xf32> -> vector<8x256xf32>
    %29 = arith.addf %21, %28 : vector<8x256xf32>
    %c15_i32 = arith.constant 15 : i32
    %30 = tpu.dynamic_rotate %12 by %c15_i32 dim 1 : vector<8x256xf32>, i32 -> vector<8x256xf32>
    %c2 = arith.constant 2 : index
    %c0_21 = arith.constant 0 : index
    %31 = vector.load %arg6[%c2, %c0_21] : memref<9x256xf32, #tpu.memory_space<vmem>>, vector<1x256xf32>
    %32 = vector.broadcast %31 : vector<1x256xf32> to vector<8x256xf32>
    %33 = arith.mulf %30, %32 : vector<8x256xf32>
    %c2_22 = arith.constant 2 : index
    %c0_23 = arith.constant 0 : index
    %c0_24 = arith.constant 0 : index
    %34 = vector.load %arg3[%c2_22, %c0_23, %c0_24] : memref<9x8x8xf32, #tpu.memory_space<vmem>>, vector<1x8x8xf32>
    %35 = vector.shape_cast %34 : vector<1x8x8xf32> to vector<8x8xf32>
    %cst_25 = arith.constant dense<0.000000e+00> : vector<8x256xf32>
    %36 = tpu.matmul %35, %33, %cst_25 {dimension_numbers = #tpu.dot_dimension_numbers<[1], [0], [0], [1], [0, 0, 1, 1], [], []>} : vector<8x8xf32>, vector<8x256xf32>, vector<8x256xf32> -> vector<8x256xf32>
    %37 = arith.addf %29, %36 : vector<8x256xf32>
    %c1_i32 = arith.constant 1 : i32
    %38 = tpu.dynamic_rotate %12 by %c1_i32 dim 1 : vector<8x256xf32>, i32 -> vector<8x256xf32>
    %c3 = arith.constant 3 : index
    %c0_26 = arith.constant 0 : index
    %39 = vector.load %arg6[%c3, %c0_26] : memref<9x256xf32, #tpu.memory_space<vmem>>, vector<1x256xf32>
    %40 = vector.broadcast %39 : vector<1x256xf32> to vector<8x256xf32>
    %41 = arith.mulf %38, %40 : vector<8x256xf32>
    %c3_27 = arith.constant 3 : index
    %c0_28 = arith.constant 0 : index
    %c0_29 = arith.constant 0 : index
    %42 = vector.load %arg3[%c3_27, %c0_28, %c0_29] : memref<9x8x8xf32, #tpu.memory_space<vmem>>, vector<1x8x8xf32>
    %43 = vector.shape_cast %42 : vector<1x8x8xf32> to vector<8x8xf32>
    %cst_30 = arith.constant dense<0.000000e+00> : vector<8x256xf32>
    %44 = tpu.matmul %43, %41, %cst_30 {dimension_numbers = #tpu.dot_dimension_numbers<[1], [0], [0], [1], [0, 0, 1, 1], [], []>} : vector<8x8xf32>, vector<8x256xf32>, vector<8x256xf32> -> vector<8x256xf32>
    %45 = arith.addf %37, %44 : vector<8x256xf32>
    %c4 = arith.constant 4 : index
    %c0_31 = arith.constant 0 : index
    %c0_32 = arith.constant 0 : index
    %46 = vector.load %arg3[%c4, %c0_31, %c0_32] : memref<9x8x8xf32, #tpu.memory_space<vmem>>, vector<1x8x8xf32>
    %47 = vector.shape_cast %46 : vector<1x8x8xf32> to vector<8x8xf32>
    %cst_33 = arith.constant dense<0.000000e+00> : vector<8x256xf32>
    %48 = tpu.matmul %47, %12, %cst_33 {dimension_numbers = #tpu.dot_dimension_numbers<[1], [0], [0], [1], [0, 0, 1, 1], [], []>} : vector<8x8xf32>, vector<8x256xf32>, vector<8x256xf32> -> vector<8x256xf32>
    %49 = arith.addf %45, %48 : vector<8x256xf32>
    %c255_i32 = arith.constant 255 : i32
    %50 = tpu.dynamic_rotate %12 by %c255_i32 dim 1 : vector<8x256xf32>, i32 -> vector<8x256xf32>
    %c5 = arith.constant 5 : index
    %c0_34 = arith.constant 0 : index
    %51 = vector.load %arg6[%c5, %c0_34] : memref<9x256xf32, #tpu.memory_space<vmem>>, vector<1x256xf32>
    %52 = vector.broadcast %51 : vector<1x256xf32> to vector<8x256xf32>
    %53 = arith.mulf %50, %52 : vector<8x256xf32>
    %c5_35 = arith.constant 5 : index
    %c0_36 = arith.constant 0 : index
    %c0_37 = arith.constant 0 : index
    %54 = vector.load %arg3[%c5_35, %c0_36, %c0_37] : memref<9x8x8xf32, #tpu.memory_space<vmem>>, vector<1x8x8xf32>
    %55 = vector.shape_cast %54 : vector<1x8x8xf32> to vector<8x8xf32>
    %cst_38 = arith.constant dense<0.000000e+00> : vector<8x256xf32>
    %56 = tpu.matmul %55, %53, %cst_38 {dimension_numbers = #tpu.dot_dimension_numbers<[1], [0], [0], [1], [0, 0, 1, 1], [], []>} : vector<8x8xf32>, vector<8x256xf32>, vector<8x256xf32> -> vector<8x256xf32>
    %57 = arith.addf %49, %56 : vector<8x256xf32>
    %c241_i32 = arith.constant 241 : i32
    %58 = tpu.dynamic_rotate %12 by %c241_i32 dim 1 : vector<8x256xf32>, i32 -> vector<8x256xf32>
    %c6 = arith.constant 6 : index
    %c0_39 = arith.constant 0 : index
    %59 = vector.load %arg6[%c6, %c0_39] : memref<9x256xf32, #tpu.memory_space<vmem>>, vector<1x256xf32>
    %60 = vector.broadcast %59 : vector<1x256xf32> to vector<8x256xf32>
    %61 = arith.mulf %58, %60 : vector<8x256xf32>
    %c6_40 = arith.constant 6 : index
    %c0_41 = arith.constant 0 : index
    %c0_42 = arith.constant 0 : index
    %62 = vector.load %arg3[%c6_40, %c0_41, %c0_42] : memref<9x8x8xf32, #tpu.memory_space<vmem>>, vector<1x8x8xf32>
    %63 = vector.shape_cast %62 : vector<1x8x8xf32> to vector<8x8xf32>
    %cst_43 = arith.constant dense<0.000000e+00> : vector<8x256xf32>
    %64 = tpu.matmul %63, %61, %cst_43 {dimension_numbers = #tpu.dot_dimension_numbers<[1], [0], [0], [1], [0, 0, 1, 1], [], []>} : vector<8x8xf32>, vector<8x256xf32>, vector<8x256xf32> -> vector<8x256xf32>
    %65 = arith.addf %57, %64 : vector<8x256xf32>
    %c240_i32 = arith.constant 240 : i32
    %66 = tpu.dynamic_rotate %12 by %c240_i32 dim 1 : vector<8x256xf32>, i32 -> vector<8x256xf32>
    %c7 = arith.constant 7 : index
    %c0_44 = arith.constant 0 : index
    %67 = vector.load %arg6[%c7, %c0_44] : memref<9x256xf32, #tpu.memory_space<vmem>>, vector<1x256xf32>
    %68 = vector.broadcast %67 : vector<1x256xf32> to vector<8x256xf32>
    %69 = arith.mulf %66, %68 : vector<8x256xf32>
    %c7_45 = arith.constant 7 : index
    %c0_46 = arith.constant 0 : index
    %c0_47 = arith.constant 0 : index
    %70 = vector.load %arg3[%c7_45, %c0_46, %c0_47] : memref<9x8x8xf32, #tpu.memory_space<vmem>>, vector<1x8x8xf32>
    %71 = vector.shape_cast %70 : vector<1x8x8xf32> to vector<8x8xf32>
    %cst_48 = arith.constant dense<0.000000e+00> : vector<8x256xf32>
    %72 = tpu.matmul %71, %69, %cst_48 {dimension_numbers = #tpu.dot_dimension_numbers<[1], [0], [0], [1], [0, 0, 1, 1], [], []>} : vector<8x8xf32>, vector<8x256xf32>, vector<8x256xf32> -> vector<8x256xf32>
    %73 = arith.addf %65, %72 : vector<8x256xf32>
    %c239_i32 = arith.constant 239 : i32
    %74 = tpu.dynamic_rotate %12 by %c239_i32 dim 1 : vector<8x256xf32>, i32 -> vector<8x256xf32>
    %c8 = arith.constant 8 : index
    %c0_49 = arith.constant 0 : index
    %75 = vector.load %arg6[%c8, %c0_49] : memref<9x256xf32, #tpu.memory_space<vmem>>, vector<1x256xf32>
    %76 = vector.broadcast %75 : vector<1x256xf32> to vector<8x256xf32>
    %77 = arith.mulf %74, %76 : vector<8x256xf32>
    %c8_50 = arith.constant 8 : index
    %c0_51 = arith.constant 0 : index
    %c0_52 = arith.constant 0 : index
    %78 = vector.load %arg3[%c8_50, %c0_51, %c0_52] : memref<9x8x8xf32, #tpu.memory_space<vmem>>, vector<1x8x8xf32>
    %79 = vector.shape_cast %78 : vector<1x8x8xf32> to vector<8x8xf32>
    %cst_53 = arith.constant dense<0.000000e+00> : vector<8x256xf32>
    %80 = tpu.matmul %79, %77, %cst_53 {dimension_numbers = #tpu.dot_dimension_numbers<[1], [0], [0], [1], [0, 0, 1, 1], [], []>} : vector<8x8xf32>, vector<8x256xf32>, vector<8x256xf32> -> vector<8x256xf32>
    %81 = arith.addf %73, %80 : vector<8x256xf32>
    %82 = vector.broadcast %4 : vector<8x1xf32> to vector<8x256xf32>
    %83 = arith.addf %81, %82 : vector<8x256xf32>
    %cst_54 = arith.constant 0.000000e+00 : f32
    %84 = vector.broadcast %cst_54 : f32 to vector<8x256xf32>
    %85 = arith.maximumf %83, %84 : vector<8x256xf32>
    %cst_55 = arith.constant dense<0.000000e+00> : vector<16x256xf32>
    %86 = tpu.matmul %1, %85, %cst_55 {dimension_numbers = #tpu.dot_dimension_numbers<[1], [0], [0], [1], [0, 0, 1, 1], [], []>} : vector<16x8xf32>, vector<8x256xf32>, vector<16x256xf32> -> vector<16x256xf32>
    %87 = vector.broadcast %5 : vector<16x1xf32> to vector<16x256xf32>
    %88 = arith.addf %86, %87 : vector<16x256xf32>
    %89 = arith.addf %88, %7 : vector<16x256xf32>
    %cst_56 = arith.constant 0.000000e+00 : f32
    %90 = vector.broadcast %cst_56 : f32 to vector<16x256xf32>
    %91 = arith.maximumf %89, %90 : vector<16x256xf32>
    %c0_57 = arith.constant 0 : index
    %c0_58 = arith.constant 0 : index
    %c0_59 = arith.constant 0 : index
    %92 = vector.load %arg7[%c0_57, %c0_58, %c0_59] : memref<1x16x256xf32, #tpu.memory_space<vmem>>, vector<1x16x256xf32>
    %93 = vector.shape_cast %92 : vector<1x16x256xf32> to vector<16x256xf32>
    %94 = vector.shape_cast %91 : vector<16x256xf32> to vector<1x16x256xf32>
    tpu.vector_store %arg7[%c0_57, %c0_58, %c0_59], %94 {strides = array<i32>} : memref<1x16x256xf32, #tpu.memory_space<vmem>>, vector<1x16x256xf32>,
    return
  }
  func.func @transform_0(%arg0: i32) -> (i32, i32, i32) {
    %c0_i32 = arith.constant 0 : i32
    %c0_i32_0 = arith.constant 0 : i32
    %c0_i32_1 = arith.constant 0 : i32
    return %arg0, %c0_i32, %c0_i32_0 : i32, i32, i32
  }
  func.func @transform_1(%arg0: i32) -> (i32, i32) {
    %c0_i32 = arith.constant 0 : i32
    %c0_i32_0 = arith.constant 0 : i32
    %c0_i32_1 = arith.constant 0 : i32
    return %c0_i32, %c0_i32_0 : i32, i32
  }
  func.func @transform_2(%arg0: i32) -> (i32, i32, i32) {
    %c0_i32 = arith.constant 0 : i32
    %c0_i32_0 = arith.constant 0 : i32
    %c0_i32_1 = arith.constant 0 : i32
    %c0_i32_2 = arith.constant 0 : i32
    return %c0_i32, %c0_i32_0, %c0_i32_1 : i32, i32, i32
  }
  func.func @transform_3(%arg0: i32) -> (i32, i32) {
    %c0_i32 = arith.constant 0 : i32
    %c0_i32_0 = arith.constant 0 : i32
    %c0_i32_1 = arith.constant 0 : i32
    return %c0_i32, %c0_i32_0 : i32, i32
  }
  func.func @transform_4(%arg0: i32) -> (i32, i32) {
    %c0_i32 = arith.constant 0 : i32
    %c0_i32_0 = arith.constant 0 : i32
    %c0_i32_1 = arith.constant 0 : i32
    return %c0_i32, %c0_i32_0 : i32, i32
  }
  func.func @transform_5(%arg0: i32) -> (i32, i32) {
    %c0_i32 = arith.constant 0 : i32
    %c0_i32_0 = arith.constant 0 : i32
    %c0_i32_1 = arith.constant 0 : i32
    return %c0_i32, %c0_i32_0 : i32, i32
  }
  func.func @transform_6(%arg0: i32) -> (i32, i32, i32) {
    %c0_i32 = arith.constant 0 : i32
    %c0_i32_0 = arith.constant 0 : i32
    %c0_i32_1 = arith.constant 0 : i32
    return %arg0, %c0_i32, %c0_i32_0 : i32, i32, i32
  }
}

</mosaic_0001>

<llo_original>
// kernel: tpu_custom_call.1
$region0: #{tpu_custom_call.1}
  #allocation0 [shape = 'u32[]', space=smem, size = 0x4, offset = 0x4, fixed_abs, tag = 'smem constant byte address 0x4 - core index']
  #allocation1 [shape = 'u32[72,128]{1,0:T(1,128)}', space=vmem, size = 0x9000, scoped, tag = 'internal scratch']
  %s0 = inlined_call_operand.vmem [shape: f32[2,16,256], index: 0, kind: input, shape index: {}]
  %s1 = inlined_call_operand.vmem [shape: f32[8,16], index: 1, kind: input, shape index: {}]
  %s2 = inlined_call_operand.vmem [shape: f32[9,8,8], index: 2, kind: input, shape index: {}]
  %s3 = inlined_call_operand.vmem [shape: f32[16,8], index: 3, kind: input, shape index: {}]
  %s4 = inlined_call_operand.vmem [shape: f32[16,3], index: 4, kind: input, shape index: {}]
  %s5 = inlined_call_operand.vmem [shape: f32[9,256], index: 5, kind: input, shape index: {}]
  %s6 = inlined_call_operand.hbm [shape: f32[2,16,256], index: 6, kind: output, shape index: {}]
  %s7 = sld [smem:[#allocation0]]
  $region57: #{tpu_custom_call.1} parent=0
    _
  %s9 = ssub.s32 1, %s7
  %s10 = scalar_select 0, %s9, %s7
  $region1: #{tpu_custom_call.1} parent=0
    #allocation2 [shape = 'u8[32768]{0}', space=vmem, size = 0x8000, scoped, tag = 'output window, operand 0']
    #allocation3 [shape = 's32[2]{0}', space=sflag, size = 0x8, scoped, tag = 'scoped memory for tpu_custom_call.1']
    %11 = vsyncpa [#allocation3], 0
    %s12 = scalar_lea.sflag [#allocation3], 1
    %13 = vsyncpa %s12, 0
    loop: start=0, step=1, limit=4
    $region2: #{tpu_custom_call.1} parent=1 // loop_pre_header
      _
    $region3: #{tpu_custom_call.1} parent=1 // loop_header
      %s15 = sphi 0, %s19
      %p16 = scmp.ge.s32.totalorder %s15, 4
      %s25 = sphi 0, %s27
      %s28 = sphi 0, %s25
      %s29 = sphi 0, %s28
      %s45 = sphi 0, %s29
      %s49 = sphi 0, %s49
      %s51 = sphi 0, %s49
      %s52 = sphi 0, %s51
      %s66 = sphi 0, %s52
      %s70 = sphi 0, %s70
      %s72 = sphi 0, %s70
      %s73 = sphi 0, %s72
      %s87 = sphi 0, %s73
      %s91 = sphi 0, %s91
      %s93 = sphi 0, %s91
      %s94 = sphi 0, %s93
      %s108 = sphi 0, %s94
      %s112 = sphi 0, %s112
      %s114 = sphi 0, %s112
      %s115 = sphi 0, %s114
      %s129 = sphi 0, %s115
      %s133 = sphi 0, %s133
      %s135 = sphi 0, %s133
      %s136 = sphi 0, %s135
      %s150 = sphi 0, %s136
      %s156 = sphi 0, %s158
      %s159 = sphi 0, %s156
      %s160 = sphi 0, %s159
      %s176 = sphi 0, %s160
    $region4: #{tpu_custom_call.1} parent=1 // loop_header_branch
      %18 = sbr.rel (%p16) target = $region8
    $region5: #{tpu_custom_call.1} parent=1 // loop_body
      %s20 = ssub.s32 %s15, 1
      %s21 = ssub.s32 %s15, 2
      %s22 = sadd.s32 %s15, 1
      %s23 = ssub.s32 %s15, %s22
      %p24 = scmp.eq.s32.totalorder %s23, 0
      %s26 = sadd.s32 %s25, 1
      %s27 = scalar_select %p24, %s25, %s26
      %p30 = pneg %p24
      %p31 = scmp.eq.s32.totalorder %s15, 1
      %p32 = por %p30, %p31
      %p33 = scmp.ne.s32.totalorder %s25, %s28
      %p34 = scmp.eq.s32.totalorder %s15, 0
      %p35 = por %p33, %p34
      %p36 = scmp.ne.s32.totalorder %s25, %s28
      %p37 = scmp.eq.s32.totalorder %s20, 1
      %p38 = por %p36, %p37
      %p39 = scmp.ne.s32.totalorder %s28, %s29
      %p40 = scmp.eq.s32.totalorder %s20, 0
      %p41 = por %p39, %p40
      %p42 = scmp.ne.s32.totalorder %s28, %s29
      %p43 = scmp.eq.s32.totalorder %s21, 1
      %p44 = por %p42, %p43
      %p46 = scmp.ne.s32.totalorder %s29, %s45
      %p47 = scmp.eq.s32.totalorder %s21, 0
      %p48 = por %p46, %p47
      %s50 = sadd.s32 %s49, 1
      %p53 = scmp.eq.s32.totalorder %s15, 1
      %p54 = scmp.ne.s32.totalorder %s49, %s51
      %p55 = scmp.eq.s32.totalorder %s15, 0
      %p56 = por %p54, %p55
      %p57 = scmp.ne.s32.totalorder %s49, %s51
      %p58 = scmp.eq.s32.totalorder %s20, 1
      %p59 = por %p57, %p58
      %p60 = scmp.ne.s32.totalorder %s51, %s52
      %p61 = scmp.eq.s32.totalorder %s20, 0
      %p62 = por %p60, %p61
      %p63 = scmp.ne.s32.totalorder %s51, %s52
      %p64 = scmp.eq.s32.totalorder %s21, 1
      %p65 = por %p63, %p64
      %p67 = scmp.ne.s32.totalorder %s52, %s66
      %p68 = scmp.eq.s32.totalorder %s21, 0
      %p69 = por %p67, %p68
      %s71 = sadd.s32 %s70, 1
      %p74 = scmp.eq.s32.totalorder %s15, 1
      %p75 = scmp.ne.s32.totalorder %s70, %s72
      %p76 = scmp.eq.s32.totalorder %s15, 0
      %p77 = por %p75, %p76
      %p78 = scmp.ne.s32.totalorder %s70, %s72
      %p79 = scmp.eq.s32.totalorder %s20, 1
      %p80 = por %p78, %p79
      %p81 = scmp.ne.s32.totalorder %s72, %s73
      %p82 = scmp.eq.s32.totalorder %s20, 0
      %p83 = por %p81, %p82
      %p84 = scmp.ne.s32.totalorder %s72, %s73
      %p85 = scmp.eq.s32.totalorder %s21, 1
      %p86 = por %p84, %p85
      %p88 = scmp.ne.s32.totalorder %s73, %s87
      %p89 = scmp.eq.s32.totalorder %s21, 0
      %p90 = por %p88, %p89
      %s92 = sadd.s32 %s91, 1
      %p95 = scmp.eq.s32.totalorder %s15, 1
      %p96 = scmp.ne.s32.totalorder %s91, %s93
      %p97 = scmp.eq.s32.totalorder %s15, 0
      %p98 = por %p96, %p97
      %p99 = scmp.ne.s32.totalorder %s91, %s93
      %p100 = scmp.eq.s32.totalorder %s20, 1
      %p101 = por %p99, %p100
      %p102 = scmp.ne.s32.totalorder %s93, %s94
      %p103 = scmp.eq.s32.totalorder %s20, 0
      %p104 = por %p102, %p103
      %p105 = scmp.ne.s32.totalorder %s93, %s94
      %p106 = scmp.eq.s32.totalorder %s21, 1
      %p107 = por %p105, %p106
      %p109 = scmp.ne.s32.totalorder %s94, %s108
      %p110 = scmp.eq.s32.totalorder %s21, 0
      %p111 = por %p109, %p110
      %s113 = sadd.s32 %s112, 1
      %p116 = scmp.eq.s32.totalorder %s15, 1
      %p117 = scmp.ne.s32.totalorder %s112, %s114
      %p118 = scmp.eq.s32.totalorder %s15, 0
      %p119 = por %p117, %p118
      %p120 = scmp.ne.s32.totalorder %s112, %s114
      %p121 = scmp.eq.s32.totalorder %s20, 1
      %p122 = por %p120, %p121
      %p123 = scmp.ne.s32.totalorder %s114, %s115
      %p124 = scmp.eq.s32.totalorder %s20, 0
      %p125 = por %p123, %p124
      %p126 = scmp.ne.s32.totalorder %s114, %s115
      %p127 = scmp.eq.s32.totalorder %s21, 1
      %p128 = por %p126, %p127
      %p130 = scmp.ne.s32.totalorder %s115, %s129
      %p131 = scmp.eq.s32.totalorder %s21, 0
      %p132 = por %p130, %p131
      %s134 = sadd.s32 %s133, 1
      %p137 = scmp.eq.s32.totalorder %s15, 1
      %p138 = scmp.ne.s32.totalorder %s133, %s135
      %p139 = scmp.eq.s32.totalorder %s15, 0
      %p140 = por %p138, %p139
      %p141 = scmp.ne.s32.totalorder %s133, %s135
      %p142 = scmp.eq.s32.totalorder %s20, 1
      %p143 = por %p141, %p142
      %p144 = scmp.ne.s32.totalorder %s135, %s136
      %p145 = scmp.eq.s32.totalorder %s20, 0
      %p146 = por %p144, %p145
      %p147 = scmp.ne.s32.totalorder %s135, %s136
      %p148 = scmp.eq.s32.totalorder %s21, 1
      %p149 = por %p147, %p148
      %p151 = scmp.ne.s32.totalorder %s136, %s150
      %p152 = scmp.eq.s32.totalorder %s21, 0
      %p153 = por %p151, %p152
      %s154 = ssub.s32 %s15, %s22
      %p155 = scmp.eq.s32.totalorder %s154, 0
      %s157 = sadd.s32 %s156, 1
      %s158 = scalar_select %p155, %s156, %s157
      %p161 = pneg %p155
      %p162 = scmp.eq.s32.totalorder %s15, 1
      %p163 = por %p161, %p162
      %p164 = scmp.ne.s32.totalorder %s156, %s159
      %p165 = scmp.eq.s32.totalorder %s15, 0
      %p166 = por %p164, %p165
      %p167 = scmp.ne.s32.totalorder %s156, %s159
      %p168 = scmp.eq.s32.totalorder %s20, 1
      %p169 = por %p167, %p168
      %p170 = scmp.ne.s32.totalorder %s159, %s160
      %p171 = scmp.eq.s32.totalorder %s20, 0
      %p172 = por %p170, %p171
      %p173 = scmp.ne.s32.totalorder %s159, %s160
      %p174 = scmp.eq.s32.totalorder %s21, 1
      %p175 = por %p173, %p174
      %p177 = scmp.ne.s32.totalorder %s160, %s176
      %p178 = scmp.eq.s32.totalorder %s21, 0
      %p179 = por %p177, %p178
      %p180 = scmp.le.s32.totalorder 1, %s15
      %p181 = scmp.lt.s32.totalorder %s15, 3
      %p182 = pnand %p180, %p181
      %p183 = pneg %p182
      // Predicated region
      $region9: #{tpu_custom_call.1} parent=5 // pred_check
        _
      $region10: #{tpu_custom_call.1} parent=5 // pred_check_branch
        %185 = sbr.rel (%p182) target = $region12
      $region11: #{tpu_custom_call.1} parent=5 // pred_region
        %s186 = ssub.s32 %s15, 1
        // Predicated region
        $region13: #{tpu_custom_call.1} parent=11 // pred_check
          %p187 = pneg %p62
        $region14: #{tpu_custom_call.1} parent=11 // pred_check_branch
          %189 = sbr.rel (%p187) target = $region16
        $region15: #{tpu_custom_call.1} parent=11 // pred_region
          _
        $region16: #{tpu_custom_call.1} parent=11 // pred_fallthru
          _
        // Predicated region
        $region17: #{tpu_custom_call.1} parent=11 // pred_check
          %p190 = pneg %p83
        $region18: #{tpu_custom_call.1} parent=11 // pred_check_branch
          %192 = sbr.rel (%p190) target = $region20
        $region19: #{tpu_custom_call.1} parent=11 // pred_region
          _
        $region20: #{tpu_custom_call.1} parent=11 // pred_fallthru
          _
        // Predicated region
        $region21: #{tpu_custom_call.1} parent=11 // pred_check
          %p193 = pneg %p104
        $region22: #{tpu_custom_call.1} parent=11 // pred_check_branch
          %195 = sbr.rel (%p193) target = $region24
        $region23: #{tpu_custom_call.1} parent=11 // pred_region
          _
        $region24: #{tpu_custom_call.1} parent=11 // pred_fallthru
          _
        // Predicated region
        $region25: #{tpu_custom_call.1} parent=11 // pred_check
          %p196 = pneg %p125
        $region26: #{tpu_custom_call.1} parent=11 // pred_check_branch
          %198 = sbr.rel (%p196) target = $region28
        $region27: #{tpu_custom_call.1} parent=11 // pred_region
          _
        $region28: #{tpu_custom_call.1} parent=11 // pred_fallthru
          _
        // Predicated region
        $region29: #{tpu_custom_call.1} parent=11 // pred_check
          %p199 = pneg %p146
        $region30: #{tpu_custom_call.1} parent=11 // pred_check_branch
          %201 = sbr.rel (%p199) target = $region32
        $region31: #{tpu_custom_call.1} parent=11 // pred_region
          _
        $region32: #{tpu_custom_call.1} parent=11 // pred_fallthru
          _
      $region12: #{tpu_custom_call.1} parent=5 // pred_fallthru
        _
      %p202 = scmp.lt.s32.totalorder %s15, 2
      // Predicated region
      $region33: #{tpu_custom_call.1} parent=5 // pred_check
        %p203 = pneg %p202
      $region34: #{tpu_custom_call.1} parent=5 // pred_check_branch
        %205 = sbr.rel (%p203) target = $region36
      $region35: #{tpu_custom_call.1} parent=5 // pred_region
        // Predicated region
        $region37: #{tpu_custom_call.1} parent=35 // pred_check
          %p206 = pneg %p35
        $region38: #{tpu_custom_call.1} parent=35 // pred_check_branch
          %208 = sbr.rel (%p206) target = $region40
        $region39: #{tpu_custom_call.1} parent=35 // pred_region
          %p209 = scmp.lt.s32.totalorder %s15, 1
          %s210 = scalar_select %p209, %s15, 1
          %s211 = smul.addr %s210, 4
          %s212 = smul.addr %s211, 8
          %s213 = scalar_lea.vmem %s0, %s212
        $region40: #{tpu_custom_call.1} parent=35 // pred_fallthru
          _
      $region36: #{tpu_custom_call.1} parent=5 // pred_fallthru
        _
      %p214 = scmp.le.s32.totalorder 1, %s15
      %p215 = scmp.lt.s32.totalorder %s15, 3
      %p216 = pnand %p214, %p215
      %p217 = pneg %p216
      // Predicated region
      $region41: #{tpu_custom_call.1} parent=5 // pred_check
        _
      $region42: #{tpu_custom_call.1} parent=5 // pred_check_branch
        %219 = sbr.rel (%p216) target = $region44
      $region43: #{tpu_custom_call.1} parent=5 // pred_region
        %s220 = ssub.s32 %s15, 1
        %p221 = scmp.lt.s32.totalorder %s20, 1
        %s222 = scalar_select %p221, %s20, 1
        %s223 = smul.addr %s222, 4
        %s224 = smul.addr %s223, 8
        %s225 = scalar_lea.vmem %s0, %s224
        %p226 = pneg %p41
        %p227 = pneg %p38
        %p228 = pneg %p62
        %p229 = pneg %p59
        %p230 = pneg %p83
        %p231 = pneg %p80
        %p232 = pneg %p104
        %p233 = pneg %p101
        %p234 = pneg %p125
        %p235 = pneg %p122
        %p236 = pneg %p146
        %p237 = pneg %p143
        %p238 = pneg %p172
        %p239 = pneg %p169
        %s240 = sand.u32 %s159, 1
        %s241 = scalar_lea.sflag [#allocation3], %s240
        %s242 = sand.u32 %s159, 1
        %s243 = smul.addr %s242, 32
        %s244 = scalar_lea.vmem [#allocation2], %s243
        %p245 = scmp.lt.s32.totalorder %s20, 1
        %s246 = scalar_select %p245, %s20, 1
        %s247 = smul.addr %s246, 4
        %s248 = smul.addr %s247, 8
        %s249 = scalar_lea.vmem %s0, %s248
        %v250 = vld [vmem:[%s1] sm:$0xff]
        %v251 = vld [vmem:[%s3] sm:$0xff]
        %v252 = vld [vmem:[%s3 + $0x8] sm:$0xff]
        %v253 = vld [vmem:[%s4] sm:$0xff]
        %v254 = vld [vmem:[%s4 + $0x8] sm:$0xff]
        %v255 = vld [vmem:[%s249] sm:$0xff]
        %v256 = vld [vmem:[%s249 + $0x8] sm:$0xff]
        %v257 = vld [vmem:[%s249 + $0x10] sm:$0xff]
        %v258 = vld [vmem:[%s249 + $0x18] sm:$0xff]
        %260 = vset.pattern.permute.xlu0 0
        %261 = vperm.xlu0 %260, %v253
        %v262 = vpop.permute.xlu0 %261
        %vm264 = vcmask 130048
        %v266 = vsel %vm264, %v250, 0
        %268 = vmatpush.msra.mxu0 0.0
        %269 = vmatpush.msra.mxu0 0.0
        %270 = vmatpush.msra.mxu0 0.0
        %271 = vmatpush.msra.mxu0 0.0
        %272 = vmatpush.msra.mxu0 0.0
        %273 = vmatpush.msra.mxu0 0.0
        %274 = vmatpush.msra.mxu0 0.0
        %275 = vmatpush.msra.mxu0 0.0
        %276 = vmatpush.msra.mxu0 0.0
        %277 = vmatpush.msra.mxu0 0.0
        %278 = vmatpush.msra.mxu0 0.0
        %279 = vmatpush.msra.mxu0 0.0
        %280 = vmatpush.msra.mxu0 0.0
        %281 = vmatpush.msra.mxu0 0.0
        %282 = vmatpush.msra.mxu0 %v257
        %283 = vmatpush.msra.mxu0 %v255
        %284 = vmatmul.f32.gmra.mxu0 %v266
        %v285 = vpop.f32.mrf.mxu0
        %v286 = vadd.f32 %v262, %v285
        %287 = vdwg.mxu0
        %288 = vmatpush.msra.mxu0 0.0
        %289 = vmatpush.msra.mxu0 0.0
        %290 = vmatpush.msra.mxu0 0.0
        %291 = vmatpush.msra.mxu0 0.0
        %292 = vmatpush.msra.mxu0 0.0
        %293 = vmatpush.msra.mxu0 0.0
        %294 = vmatpush.msra.mxu0 0.0
        %295 = vmatpush.msra.mxu0 0.0
        %296 = vmatpush.msra.mxu0 0.0
        %297 = vmatpush.msra.mxu0 0.0
        %298 = vmatpush.msra.mxu0 0.0
        %299 = vmatpush.msra.mxu0 0.0
        %300 = vmatpush.msra.mxu0 0.0
        %301 = vmatpush.msra.mxu0 0.0
        %302 = vmatpush.msra.mxu0 %v258
        %303 = vmatpush.msra.mxu0 %v256
        %304 = vmatmul.f32.gmra.mxu0 %v266
        %v305 = vpop.f32.mrf.mxu0
        %v306 = vadd.f32 %v262, %v305
        %307 = vdwg.mxu0
        %v308 = vmax.f32 %v286, 0.0
        %v309 = vmax.f32 %v306, 0.0
        %310 = vrot.lane.b32.xlu0 %v308, 17
        %v311 = vpop.permute.xlu0 %310
        %312 = vrot.lane.b32.xlu0 %v309, 17
        %v313 = vpop.permute.xlu0 %312
        %v314 = vlaneseq
        %v315 = vand.u32 %v314, 127
        %vm316 = vcmp.lt.s32.totalorder %v315, 17
        %v317 = vsel %vm316, %v311, %v313
        %v318 = vsel %vm316, %v313, %v311
        %v319 = vld [vmem:[%s5] ss:$8 sm:$0x3]
        %v321 = vperm.slane %v319, 0
        %v322 = vperm.slane %v319, 1
        %v325 = vmul.f32 %v318, %v321
        %v326 = vmul.f32 %v317, %v322
        %v327 = vld [vmem:[%s2] sm:$0xff]
        %328 = vrot.lane.b32.xlu0 %v308, 16
        %v329 = vpop.permute.xlu0 %328
        %330 = vrot.lane.b32.xlu0 %v309, 16
        %v331 = vpop.permute.xlu0 %330
        %vm332 = vcmp.lt.s32.totalorder %v315, 16
        %v333 = vsel %vm332, %v329, %v331
        %v334 = vsel %vm332, %v331, %v329
        %s335 = scalar_lea.vmem %s5, 1
        %v336 = vld [vmem:[%s335] ss:$8 sm:$0x3]
        %v338 = vperm.slane %v336, 0
        %v339 = vperm.slane %v336, 1
        %v342 = vmul.f32 %v334, %v338
        %v343 = vmul.f32 %v333, %v339
        %s344 = scalar_lea.vmem %s2, 8
        %v345 = vld [vmem:[%s344] sm:$0xff]
        %vm346 = vcmask 64512
        %v348 = vsel %vm346, %v345, 0
        %350 = vmatpush.msra.mxu0 0.0
        %351 = vmatpush.msra.mxu0 0.0
        %352 = vmatpush.msra.mxu0 0.0
        %353 = vmatpush.msra.mxu0 0.0
        %354 = vmatpush.msra.mxu0 0.0
        %355 = vmatpush.msra.mxu0 0.0
        %356 = vmatpush.msra.mxu0 0.0
        %357 = vmatpush.msra.mxu0 0.0
        %358 = vmatpush.msra.mxu0 0.0
        %359 = vmatpush.msra.mxu0 0.0
        %360 = vmatpush.msra.mxu0 0.0
        %361 = vmatpush.msra.mxu0 0.0
        %362 = vmatpush.msra.mxu0 0.0
        %363 = vmatpush.msra.mxu0 0.0
        %364 = vmatpush.msra.mxu0 0.0
        %365 = vmatpush.msra.mxu0 %v342
        %366 = vmatmul.f32.gmra.mxu0 %v348
        %v367 = vpop.f32.mrf.mxu0
        %v368 = vadd.f32 0.0, %v367
        %369 = vdwg.mxu0
        %370 = vmatpush.msra.mxu0 0.0
        %371 = vmatpush.msra.mxu0 0.0
        %372 = vmatpush.msra.mxu0 0.0
        %373 = vmatpush.msra.mxu0 0.0
        %374 = vmatpush.msra.mxu0 0.0
        %375 = vmatpush.msra.mxu0 0.0
        %376 = vmatpush.msra.mxu0 0.0
        %377 = vmatpush.msra.mxu0 0.0
        %378 = vmatpush.msra.mxu0 0.0
        %379 = vmatpush.msra.mxu0 0.0
        %380 = vmatpush.msra.mxu0 0.0
        %381 = vmatpush.msra.mxu0 0.0
        %382 = vmatpush.msra.mxu0 0.0
        %383 = vmatpush.msra.mxu0 0.0
        %384 = vmatpush.msra.mxu0 0.0
        %385 = vmatpush.msra.mxu0 %v343
        %386 = vmatmul.f32.gmra.mxu0 %v348
        %v387 = vpop.f32.mrf.mxu0
        %v388 = vadd.f32 0.0, %v387
        %389 = vdwg.mxu0
        %v391 = vsel %vm346, %v327, 0
        %393 = vmatpush.msra.mxu0 0.0
        %394 = vmatpush.msra.mxu0 0.0
        %395 = vmatpush.msra.mxu0 0.0
        %396 = vmatpush.msra.mxu0 0.0
        %397 = vmatpush.msra.mxu0 0.0
        %398 = vmatpush.msra.mxu0 0.0
        %399 = vmatpush.msra.mxu0 0.0
        %400 = vmatpush.msra.mxu0 0.0
        %401 = vmatpush.msra.mxu0 0.0
        %402 = vmatpush.msra.mxu0 0.0
        %403 = vmatpush.msra.mxu0 0.0
        %404 = vmatpush.msra.mxu0 0.0
        %405 = vmatpush.msra.mxu0 0.0
        %406 = vmatpush.msra.mxu0 0.0
        %407 = vmatpush.msra.mxu0 0.0
        %408 = vmatpush.msra.mxu0 %v325
        %409 = vmatmul.f32.gmra.mxu0 %v391
        %v410 = vpop.f32.mrf.mxu0
        %v411 = vadd.f32 %v368, %v410
        %412 = vdwg.mxu0
        %413 = vmatpush.msra.mxu0 0.0
        %414 = vmatpush.msra.mxu0 0.0
        %415 = vmatpush.msra.mxu0 0.0
        %416 = vmatpush.msra.mxu0 0.0
        %417 = vmatpush.msra.mxu0 0.0
        %418 = vmatpush.msra.mxu0 0.0
        %419 = vmatpush.msra.mxu0 0.0
        %420 = vmatpush.msra.mxu0 0.0
        %421 = vmatpush.msra.mxu0 0.0
        %422 = vmatpush.msra.mxu0 0.0
        %423 = vmatpush.msra.mxu0 0.0
        %424 = vmatpush.msra.mxu0 0.0
        %425 = vmatpush.msra.mxu0 0.0
        %426 = vmatpush.msra.mxu0 0.0
        %427 = vmatpush.msra.mxu0 0.0
        %428 = vmatpush.msra.mxu0 %v326
        %429 = vmatmul.f32.gmra.mxu0 %v391
        %v430 = vpop.f32.mrf.mxu0
        %v431 = vadd.f32 %v388, %v430
        %432 = vdwg.mxu0
        %433 = vrot.lane.b32.xlu0 %v308, 15
        %v434 = vpop.permute.xlu0 %433
        %435 = vrot.lane.b32.xlu0 %v309, 15
        %v436 = vpop.permute.xlu0 %435
        %vm437 = vcmp.lt.s32.totalorder %v315, 15
        %v438 = vsel %vm437, %v434, %v436
        %v439 = vsel %vm437, %v436, %v434
        %s440 = scalar_lea.vmem %s5, 2
        %v441 = vld [vmem:[%s440] ss:$8 sm:$0x3]
        %v443 = vperm.slane %v441, 0
        %v444 = vperm.slane %v441, 1
        %v447 = vmul.f32 %v439, %v443
        %v448 = vmul.f32 %v438, %v444
        %s449 = scalar_lea.vmem %s2, 16
        %v450 = vld [vmem:[%s449] sm:$0xff]
        %v452 = vsel %vm346, %v450, 0
        %454 = vmatpush.msra.mxu0 0.0
        %455 = vmatpush.msra.mxu0 0.0
        %456 = vmatpush.msra.mxu0 0.0
        %457 = vmatpush.msra.mxu0 0.0
        %458 = vmatpush.msra.mxu0 0.0
        %459 = vmatpush.msra.mxu0 0.0
        %460 = vmatpush.msra.mxu0 0.0
        %461 = vmatpush.msra.mxu0 0.0
        %462 = vmatpush.msra.mxu0 0.0
        %463 = vmatpush.msra.mxu0 0.0
        %464 = vmatpush.msra.mxu0 0.0
        %465 = vmatpush.msra.mxu0 0.0
        %466 = vmatpush.msra.mxu0 0.0
        %467 = vmatpush.msra.mxu0 0.0
        %468 = vmatpush.msra.mxu0 0.0
        %469 = vmatpush.msra.mxu0 %v447
        %470 = vmatmul.f32.gmra.mxu0 %v452
        %v471 = vpop.f32.mrf.mxu0
        %v472 = vadd.f32 0.0, %v471
        %473 = vdwg.mxu0
        %474 = vmatpush.msra.mxu0 0.0
        %475 = vmatpush.msra.mxu0 0.0
        %476 = vmatpush.msra.mxu0 0.0
        %477 = vmatpush.msra.mxu0 0.0
        %478 = vmatpush.msra.mxu0 0.0
        %479 = vmatpush.msra.mxu0 0.0
        %480 = vmatpush.msra.mxu0 0.0
        %481 = vmatpush.msra.mxu0 0.0
        %482 = vmatpush.msra.mxu0 0.0
        %483 = vmatpush.msra.mxu0 0.0
        %484 = vmatpush.msra.mxu0 0.0
        %485 = vmatpush.msra.mxu0 0.0
        %486 = vmatpush.msra.mxu0 0.0
        %487 = vmatpush.msra.mxu0 0.0
        %488 = vmatpush.msra.mxu0 0.0
        %489 = vmatpush.msra.mxu0 %v448
        %490 = vmatmul.f32.gmra.mxu0 %v452
        %v491 = vpop.f32.mrf.mxu0
        %v492 = vadd.f32 0.0, %v491
        %493 = vdwg.mxu0
        %v494 = vadd.f32 %v411, %v472
        %v495 = vadd.f32 %v431, %v492
        %496 = vrot.lane.b32.xlu0 %v308, 1
        %v497 = vpop.permute.xlu0 %496
        %498 = vrot.lane.b32.xlu0 %v309, 1
        %v499 = vpop.permute.xlu0 %498
        %vm500 = vcmp.lt.s32.totalorder %v315, 1
        %v501 = vsel %vm500, %v497, %v499
        %v502 = vsel %vm500, %v499, %v497
        %s503 = scalar_lea.vmem %s5, 3
        %v504 = vld [vmem:[%s503] ss:$8 sm:$0x3]
        %v506 = vperm.slane %v504, 0
        %v507 = vperm.slane %v504, 1
        %v510 = vmul.f32 %v502, %v506
        %v511 = vmul.f32 %v501, %v507
        %s512 = scalar_lea.vmem %s2, 24
        %v513 = vld [vmem:[%s512] sm:$0xff]
        %v515 = vsel %vm346, %v513, 0
        %517 = vmatpush.msra.mxu0 0.0
        %518 = vmatpush.msra.mxu0 0.0
        %519 = vmatpush.msra.mxu0 0.0
        %520 = vmatpush.msra.mxu0 0.0
        %521 = vmatpush.msra.mxu0 0.0
        %522 = vmatpush.msra.mxu0 0.0
        %523 = vmatpush.msra.mxu0 0.0
        %524 = vmatpush.msra.mxu0 0.0
        %525 = vmatpush.msra.mxu0 0.0
        %526 = vmatpush.msra.mxu0 0.0
        %527 = vmatpush.msra.mxu0 0.0
        %528 = vmatpush.msra.mxu0 0.0
        %529 = vmatpush.msra.mxu0 0.0
        %530 = vmatpush.msra.mxu0 0.0
        %531 = vmatpush.msra.mxu0 0.0
        %532 = vmatpush.msra.mxu0 %v510
        %533 = vmatmul.f32.gmra.mxu0 %v515
        %v534 = vpop.f32.mrf.mxu0
        %v535 = vadd.f32 0.0, %v534
        %536 = vdwg.mxu0
        %537 = vmatpush.msra.mxu0 0.0
        %538 = vmatpush.msra.mxu0 0.0
        %539 = vmatpush.msra.mxu0 0.0
        %540 = vmatpush.msra.mxu0 0.0
        %541 = vmatpush.msra.mxu0 0.0
        %542 = vmatpush.msra.mxu0 0.0
        %543 = vmatpush.msra.mxu0 0.0
        %544 = vmatpush.msra.mxu0 0.0
        %545 = vmatpush.msra.mxu0 0.0
        %546 = vmatpush.msra.mxu0 0.0
        %547 = vmatpush.msra.mxu0 0.0
        %548 = vmatpush.msra.mxu0 0.0
        %549 = vmatpush.msra.mxu0 0.0
        %550 = vmatpush.msra.mxu0 0.0
        %551 = vmatpush.msra.mxu0 0.0
        %552 = vmatpush.msra.mxu0 %v511
        %553 = vmatmul.f32.gmra.mxu0 %v515
        %v554 = vpop.f32.mrf.mxu0
        %v555 = vadd.f32 0.0, %v554
        %556 = vdwg.mxu0
        %v557 = vadd.f32 %v494, %v535
        %v558 = vadd.f32 %v495, %v555
        %s559 = scalar_lea.vmem %s2, 32
        %v560 = vld [vmem:[%s559] sm:$0xff]
        %v562 = vsel %vm346, %v560, 0
        %564 = vmatpush.msra.mxu0 0.0
        %565 = vmatpush.msra.mxu0 0.0
        %566 = vmatpush.msra.mxu0 0.0
        %567 = vmatpush.msra.mxu0 0.0
        %568 = vmatpush.msra.mxu0 0.0
        %569 = vmatpush.msra.mxu0 0.0
        %570 = vmatpush.msra.mxu0 0.0
        %571 = vmatpush.msra.mxu0 0.0
        %572 = vmatpush.msra.mxu0 0.0
        %573 = vmatpush.msra.mxu0 0.0
        %574 = vmatpush.msra.mxu0 0.0
        %575 = vmatpush.msra.mxu0 0.0
        %576 = vmatpush.msra.mxu0 0.0
        %577 = vmatpush.msra.mxu0 0.0
        %578 = vmatpush.msra.mxu0 0.0
        %579 = vmatpush.msra.mxu0 %v308
        %580 = vmatmul.f32.gmra.mxu0 %v562
        %v581 = vpop.f32.mrf.mxu0
        %v582 = vadd.f32 0.0, %v581
        %583 = vdwg.mxu0
        %584 = vmatpush.msra.mxu0 0.0
        %585 = vmatpush.msra.mxu0 0.0
        %586 = vmatpush.msra.mxu0 0.0
        %587 = vmatpush.msra.mxu0 0.0
        %588 = vmatpush.msra.mxu0 0.0
        %589 = vmatpush.msra.mxu0 0.0
        %590 = vmatpush.msra.mxu0 0.0
        %591 = vmatpush.msra.mxu0 0.0
        %592 = vmatpush.msra.mxu0 0.0
        %593 = vmatpush.msra.mxu0 0.0
        %594 = vmatpush.msra.mxu0 0.0
        %595 = vmatpush.msra.mxu0 0.0
        %596 = vmatpush.msra.mxu0 0.0
        %597 = vmatpush.msra.mxu0 0.0
        %598 = vmatpush.msra.mxu0 0.0
        %599 = vmatpush.msra.mxu0 %v309
        %600 = vmatmul.f32.gmra.mxu0 %v562
        %v601 = vpop.f32.mrf.mxu0
        %v602 = vadd.f32 0.0, %v601
        %603 = vdwg.mxu0
        %v604 = vadd.f32 %v557, %v582
        %v605 = vadd.f32 %v558, %v602
        %606 = vrot.lane.b32.xlu0 %v308, 127
        %v607 = vpop.permute.xlu0 %606
        %608 = vrot.lane.b32.xlu0 %v309, 127
        %v609 = vpop.permute.xlu0 %608
        %vm610 = vcmp.lt.s32.totalorder %v315, 127
        %v611 = vsel %vm610, %v607, %v609
        %v612 = vsel %vm610, %v609, %v607
        %s613 = scalar_lea.vmem %s5, 5
        %v614 = vld [vmem:[%s613] ss:$8 sm:$0x3]
        %v616 = vperm.slane %v614, 0
        %v617 = vperm.slane %v614, 1
        %v620 = vmul.f32 %v611, %v616
        %v621 = vmul.f32 %v612, %v617
        %s622 = scalar_lea.vmem %s2, 40
        %v623 = vld [vmem:[%s622] sm:$0xff]
        %v625 = vsel %vm346, %v623, 0
        %627 = vmatpush.msra.mxu0 0.0
        %628 = vmatpush.msra.mxu0 0.0
        %629 = vmatpush.msra.mxu0 0.0
        %630 = vmatpush.msra.mxu0 0.0
        %631 = vmatpush.msra.mxu0 0.0
        %632 = vmatpush.msra.mxu0 0.0
        %633 = vmatpush.msra.mxu0 0.0
        %634 = vmatpush.msra.mxu0 0.0
        %635 = vmatpush.msra.mxu0 0.0
        %636 = vmatpush.msra.mxu0 0.0
        %637 = vmatpush.msra.mxu0 0.0
        %638 = vmatpush.msra.mxu0 0.0
        %639 = vmatpush.msra.mxu0 0.0
        %640 = vmatpush.msra.mxu0 0.0
        %641 = vmatpush.msra.mxu0 0.0
        %642 = vmatpush.msra.mxu0 %v620
        %643 = vmatmul.f32.gmra.mxu0 %v625
        %v644 = vpop.f32.mrf.mxu0
        %v645 = vadd.f32 0.0, %v644
        %646 = vdwg.mxu0
        %647 = vmatpush.msra.mxu0 0.0
        %648 = vmatpush.msra.mxu0 0.0
        %649 = vmatpush.msra.mxu0 0.0
        %650 = vmatpush.msra.mxu0 0.0
        %651 = vmatpush.msra.mxu0 0.0
        %652 = vmatpush.msra.mxu0 0.0
        %653 = vmatpush.msra.mxu0 0.0
        %654 = vmatpush.msra.mxu0 0.0
        %655 = vmatpush.msra.mxu0 0.0
        %656 = vmatpush.msra.mxu0 0.0
        %657 = vmatpush.msra.mxu0 0.0
        %658 = vmatpush.msra.mxu0 0.0
        %659 = vmatpush.msra.mxu0 0.0
        %660 = vmatpush.msra.mxu0 0.0
        %661 = vmatpush.msra.mxu0 0.0
        %662 = vmatpush.msra.mxu0 %v621
        %663 = vmatmul.f32.gmra.mxu0 %v625
        %v664 = vpop.f32.mrf.mxu0
        %v665 = vadd.f32 0.0, %v664
        %666 = vdwg.mxu0
        %v667 = vadd.f32 %v604, %v645
        %v668 = vadd.f32 %v605, %v665
        %669 = vrot.lane.b32.xlu0 %v308, 113
        %v670 = vpop.permute.xlu0 %669
        %671 = vrot.lane.b32.xlu0 %v309, 113
        %v672 = vpop.permute.xlu0 %671
        %vm673 = vcmp.lt.s32.totalorder %v315, 113
        %v674 = vsel %vm673, %v670, %v672
        %v675 = vsel %vm673, %v672, %v670
        %s676 = scalar_lea.vmem %s5, 6
        %v677 = vld [vmem:[%s676] ss:$8 sm:$0x3]
        %v679 = vperm.slane %v677, 0
        %v680 = vperm.slane %v677, 1
        %v683 = vmul.f32 %v674, %v679
        %v684 = vmul.f32 %v675, %v680
        %s685 = scalar_lea.vmem %s2, 48
        %v686 = vld [vmem:[%s685] sm:$0xff]
        %v688 = vsel %vm346, %v686, 0
        %690 = vmatpush.msra.mxu0 0.0
        %691 = vmatpush.msra.mxu0 0.0
        %692 = vmatpush.msra.mxu0 0.0
        %693 = vmatpush.msra.mxu0 0.0
        %694 = vmatpush.msra.mxu0 0.0
        %695 = vmatpush.msra.mxu0 0.0
        %696 = vmatpush.msra.mxu0 0.0
        %697 = vmatpush.msra.mxu0 0.0
        %698 = vmatpush.msra.mxu0 0.0
        %699 = vmatpush.msra.mxu0 0.0
        %700 = vmatpush.msra.mxu0 0.0
        %701 = vmatpush.msra.mxu0 0.0
        %702 = vmatpush.msra.mxu0 0.0
        %703 = vmatpush.msra.mxu0 0.0
        %704 = vmatpush.msra.mxu0 0.0
        %705 = vmatpush.msra.mxu0 %v683
        %706 = vmatmul.f32.gmra.mxu0 %v688
        %v707 = vpop.f32.mrf.mxu0
        %v708 = vadd.f32 0.0, %v707
        %709 = vdwg.mxu0
        %710 = vmatpush.msra.mxu0 0.0
        %711 = vmatpush.msra.mxu0 0.0
        %712 = vmatpush.msra.mxu0 0.0
        %713 = vmatpush.msra.mxu0 0.0
        %714 = vmatpush.msra.mxu0 0.0
        %715 = vmatpush.msra.mxu0 0.0
        %716 = vmatpush.msra.mxu0 0.0
        %717 = vmatpush.msra.mxu0 0.0
        %718 = vmatpush.msra.mxu0 0.0
        %719 = vmatpush.msra.mxu0 0.0
        %720 = vmatpush.msra.mxu0 0.0
        %721 = vmatpush.msra.mxu0 0.0
        %722 = vmatpush.msra.mxu0 0.0
        %723 = vmatpush.msra.mxu0 0.0
        %724 = vmatpush.msra.mxu0 0.0
        %725 = vmatpush.msra.mxu0 %v684
        %726 = vmatmul.f32.gmra.mxu0 %v688
        %v727 = vpop.f32.mrf.mxu0
        %v728 = vadd.f32 0.0, %v727
        %729 = vdwg.mxu0
        %v730 = vadd.f32 %v667, %v708
        %v731 = vadd.f32 %v668, %v728
        %732 = vrot.lane.b32.xlu0 %v308, 112
        %v733 = vpop.permute.xlu0 %732
        %734 = vrot.lane.b32.xlu0 %v309, 112
        %v735 = vpop.permute.xlu0 %734
        %vm736 = vcmp.lt.s32.totalorder %v315, 112
        %v737 = vsel %vm736, %v733, %v735
        %v738 = vsel %vm736, %v735, %v733
        %s739 = scalar_lea.vmem %s5, 7
        %v740 = vld [vmem:[%s739] ss:$8 sm:$0x3]
        %v742 = vperm.slane %v740, 0
        %v743 = vperm.slane %v740, 1
        %v746 = vmul.f32 %v737, %v742
        %v747 = vmul.f32 %v738, %v743
        %s748 = scalar_lea.vmem %s2, 56
        %v749 = vld [vmem:[%s748] sm:$0xff]
        %v751 = vsel %vm346, %v749, 0
        %753 = vmatpush.msra.mxu0 0.0
        %754 = vmatpush.msra.mxu0 0.0
        %755 = vmatpush.msra.mxu0 0.0
        %756 = vmatpush.msra.mxu0 0.0
        %757 = vmatpush.msra.mxu0 0.0
        %758 = vmatpush.msra.mxu0 0.0
        %759 = vmatpush.msra.mxu0 0.0
        %760 = vmatpush.msra.mxu0 0.0
        %761 = vmatpush.msra.mxu0 0.0
        %762 = vmatpush.msra.mxu0 0.0
        %763 = vmatpush.msra.mxu0 0.0
        %764 = vmatpush.msra.mxu0 0.0
        %765 = vmatpush.msra.mxu0 0.0
        %766 = vmatpush.msra.mxu0 0.0
        %767 = vmatpush.msra.mxu0 0.0
        %768 = vmatpush.msra.mxu0 %v746
        %769 = vmatmul.f32.gmra.mxu0 %v751
        %v770 = vpop.f32.mrf.mxu0
        %v771 = vadd.f32 0.0, %v770
        %772 = vdwg.mxu0
        %773 = vmatpush.msra.mxu0 0.0
        %774 = vmatpush.msra.mxu0 0.0
        %775 = vmatpush.msra.mxu0 0.0
        %776 = vmatpush.msra.mxu0 0.0
        %777 = vmatpush.msra.mxu0 0.0
        %778 = vmatpush.msra.mxu0 0.0
        %779 = vmatpush.msra.mxu0 0.0
        %780 = vmatpush.msra.mxu0 0.0
        %781 = vmatpush.msra.mxu0 0.0
        %782 = vmatpush.msra.mxu0 0.0
        %783 = vmatpush.msra.mxu0 0.0
        %784 = vmatpush.msra.mxu0 0.0
        %785 = vmatpush.msra.mxu0 0.0
        %786 = vmatpush.msra.mxu0 0.0
        %787 = vmatpush.msra.mxu0 0.0
        %788 = vmatpush.msra.mxu0 %v747
        %789 = vmatmul.f32.gmra.mxu0 %v751
        %v790 = vpop.f32.mrf.mxu0
        %v791 = vadd.f32 0.0, %v790
        %792 = vdwg.mxu0
        %v793 = vadd.f32 %v730, %v771
        %v794 = vadd.f32 %v731, %v791
        %795 = vrot.lane.b32.xlu0 %v308, 111
        %v796 = vpop.permute.xlu0 %795
        %797 = vrot.lane.b32.xlu0 %v309, 111
        %v798 = vpop.permute.xlu0 %797
        %vm799 = vcmp.lt.s32.totalorder %v315, 111
        %v800 = vsel %vm799, %v796, %v798
        %v801 = vsel %vm799, %v798, %v796
        %s802 = scalar_lea.vmem %s5, 16
        %v803 = vld [vmem:[%s802] ss:$8 sm:$0x3]
        %v805 = vperm.slane %v803, 0
        %v806 = vperm.slane %v803, 1
        %v809 = vmul.f32 %v800, %v805
        %v810 = vmul.f32 %v801, %v806
        %s811 = scalar_lea.vmem %s2, 64
        %v812 = vld [vmem:[%s811] sm:$0xff]
        %v814 = vsel %vm346, %v812, 0
        %816 = vmatpush.msra.mxu0 0.0
        %817 = vmatpush.msra.mxu0 0.0
        %818 = vmatpush.msra.mxu0 0.0
        %819 = vmatpush.msra.mxu0 0.0
        %820 = vmatpush.msra.mxu0 0.0
        %821 = vmatpush.msra.mxu0 0.0
        %822 = vmatpush.msra.mxu0 0.0
        %823 = vmatpush.msra.mxu0 0.0
        %824 = vmatpush.msra.mxu0 0.0
        %825 = vmatpush.msra.mxu0 0.0
        %826 = vmatpush.msra.mxu0 0.0
        %827 = vmatpush.msra.mxu0 0.0
        %828 = vmatpush.msra.mxu0 0.0
        %829 = vmatpush.msra.mxu0 0.0
        %830 = vmatpush.msra.mxu0 0.0
        %831 = vmatpush.msra.mxu0 %v809
        %832 = vmatmul.f32.gmra.mxu0 %v814
        %v833 = vpop.f32.mrf.mxu0
        %v834 = vadd.f32 0.0, %v833
        %835 = vdwg.mxu0
        %836 = vmatpush.msra.mxu0 0.0
        %837 = vmatpush.msra.mxu0 0.0
        %838 = vmatpush.msra.mxu0 0.0
        %839 = vmatpush.msra.mxu0 0.0
        %840 = vmatpush.msra.mxu0 0.0
        %841 = vmatpush.msra.mxu0 0.0
        %842 = vmatpush.msra.mxu0 0.0
        %843 = vmatpush.msra.mxu0 0.0
        %844 = vmatpush.msra.mxu0 0.0
        %845 = vmatpush.msra.mxu0 0.0
        %846 = vmatpush.msra.mxu0 0.0
        %847 = vmatpush.msra.mxu0 0.0
        %848 = vmatpush.msra.mxu0 0.0
        %849 = vmatpush.msra.mxu0 0.0
        %850 = vmatpush.msra.mxu0 0.0
        %851 = vmatpush.msra.mxu0 %v810
        %852 = vmatmul.f32.gmra.mxu0 %v814
        %v853 = vpop.f32.mrf.mxu0
        %v854 = vadd.f32 0.0, %v853
        %855 = vdwg.mxu0
        %v856 = vadd.f32 %v793, %v834
        %v857 = vadd.f32 %v794, %v854
        %858 = vset.pattern.permute.xlu0 1
        %859 = vperm.xlu0 %858, %v253
        %v860 = vpop.permute.xlu0 %859
        %v862 = vadd.f32 %v856, %v860
        %v863 = vadd.f32 %v857, %v860
        %v864 = vmax.f32 %v862, 0.0
        %v865 = vmax.f32 %v863, 0.0
        %866 = vset.pattern.permute.xlu0 2
        %867 = vperm.xlu0 %866, %v253
        %v868 = vpop.permute.xlu0 %867
        %871 = vset.pattern.permute.xlu0 2
        %872 = vperm.xlu0 %871, %v254
        %v873 = vpop.permute.xlu0 %872
        %v876 = vsel %vm346, %v251, 0
        %v879 = vsel %vm346, %v252, 0
        %881 = vmatpush.msra.mxu0 0.0
        %882 = vmatpush.msra.mxu0 0.0
        %883 = vmatpush.msra.mxu0 0.0
        %884 = vmatpush.msra.mxu0 0.0
        %885 = vmatpush.msra.mxu0 0.0
        %886 = vmatpush.msra.mxu0 0.0
        %887 = vmatpush.msra.mxu0 0.0
        %888 = vmatpush.msra.mxu0 0.0
        %889 = vmatpush.msra.mxu0 0.0
        %890 = vmatpush.msra.mxu0 0.0
        %891 = vmatpush.msra.mxu0 0.0
        %892 = vmatpush.msra.mxu0 0.0
        %893 = vmatpush.msra.mxu0 0.0
        %894 = vmatpush.msra.mxu0 0.0
        %895 = vmatpush.msra.mxu0 0.0
        %896 = vmatpush.msra.mxu0 %v864
        %897 = vmatmul.f32.gmra.mxu0 %v876
        %v898 = vpop.f32.mrf.mxu0
        %v899 = vadd.f32 %v868, %v898
        %900 = vmatmul.f32.gmra.mxu0 %v879
        %v901 = vpop.f32.mrf.mxu0
        %v902 = vadd.f32 %v873, %v901
        %903 = vdwg.mxu0
        %904 = vmatpush.msra.mxu0 0.0
        %905 = vmatpush.msra.mxu0 0.0
        %906 = vmatpush.msra.mxu0 0.0
        %907 = vmatpush.msra.mxu0 0.0
        %908 = vmatpush.msra.mxu0 0.0
        %909 = vmatpush.msra.mxu0 0.0
        %910 = vmatpush.msra.mxu0 0.0
        %911 = vmatpush.msra.mxu0 0.0
        %912 = vmatpush.msra.mxu0 0.0
        %913 = vmatpush.msra.mxu0 0.0
        %914 = vmatpush.msra.mxu0 0.0
        %915 = vmatpush.msra.mxu0 0.0
        %916 = vmatpush.msra.mxu0 0.0
        %917 = vmatpush.msra.mxu0 0.0
        %918 = vmatpush.msra.mxu0 0.0
        %919 = vmatpush.msra.mxu0 %v865
        %920 = vmatmul.f32.gmra.mxu0 %v876
        %v921 = vpop.f32.mrf.mxu0
        %v922 = vadd.f32 %v868, %v921
        %923 = vmatmul.f32.gmra.mxu0 %v879
        %v924 = vpop.f32.mrf.mxu0
        %v925 = vadd.f32 %v873, %v924
        %926 = vdwg.mxu0
        %v927 = vadd.f32 %v899, %v255
        %v928 = vadd.f32 %v922, %v256
        %v929 = vadd.f32 %v902, %v257
        %v930 = vadd.f32 %v925, %v258
        %v931 = vmax.f32 %v927, 0.0
        %v932 = vmax.f32 %v928, 0.0
        %v933 = vmax.f32 %v929, 0.0
        %v934 = vmax.f32 %v930, 0.0
        %935 = vst [vmem:[%s244] sm:$0xff] %v931
        %936 = vst [vmem:[%s244 + $0x8] sm:$0xff] %v932
        %937 = vst [vmem:[%s244 + $0x10] sm:$0xff] %v933
        %938 = vst [vmem:[%s244 + $0x18] sm:$0xff] %v934
        %s939 = sand.u32 %s159, 1
        %s940 = scalar_lea.sflag [#allocation3], %s939
        %s941 = sand.u32 %s159, 1
        %s942 = smul.addr %s941, 32
        %s943 = scalar_lea.vmem [#allocation2], %s942
        // Predicated region
        $region45: #{tpu_custom_call.1} parent=43 // pred_check
          %p944 = pneg %p169
        $region46: #{tpu_custom_call.1} parent=43 // pred_check_branch
          %946 = sbr.rel (%p944) target = $region48
        $region47: #{tpu_custom_call.1} parent=43 // pred_region
          %948 = vsyncadd %s940, 0
          %s949 = smul.addr %s20, 4
          %s950 = smul.addr %s949, 8
          %s951 = scalar_lea.hbm %s6, %s950
          %s952 = sshll.u32 %s943, 4
          %s953 = int_to_ptr.vmem [resolvable:$true] %s952
          %s954 = sshll.u32 %s951, 4
          %s955 = int_to_ptr.hbm [resolvable:$true] %s954
          %960 = dma.vmem_to_hbm [thread:$0]  %s953, 512, %s955, %s940, 256, 256, 16
        $region48: #{tpu_custom_call.1} parent=43 // pred_fallthru
          _
      $region44: #{tpu_custom_call.1} parent=5 // pred_fallthru
        _
      %p961 = scmp.le.s32.totalorder 2, %s15
      // Predicated region
      $region49: #{tpu_custom_call.1} parent=5 // pred_check
        %p962 = pneg %p961
      $region50: #{tpu_custom_call.1} parent=5 // pred_check_branch
        %964 = sbr.rel (%p962) target = $region52
      $region51: #{tpu_custom_call.1} parent=5 // pred_region
        %s965 = ssub.s32 %s15, 2
        // Predicated region
        $region53: #{tpu_custom_call.1} parent=51 // pred_check
          %p966 = pneg %p175
        $region54: #{tpu_custom_call.1} parent=51 // pred_check_branch
          %968 = sbr.rel (%p966) target = $region56
        $region55: #{tpu_custom_call.1} parent=51 // pred_region
          %s969 = sand.u32 %s160, 1
          %s970 = scalar_lea.sflag [#allocation3], %s969
          %s971 = sand.u32 %s160, 1
          %s972 = smul.addr %s971, 32
          %s973 = scalar_lea.vmem [#allocation2], %s972
          %975 = dma.done %s970, 512
        $region56: #{tpu_custom_call.1} parent=51 // pred_fallthru
          _
      $region52: #{tpu_custom_call.1} parent=5 // pred_fallthru
        _
    $region6: #{tpu_custom_call.1} parent=1 // loop_footer
      %s19 = sadd.s32 1, %s15
    $region7: #{tpu_custom_call.1} parent=1 // loop_footer_branch
      %14 = sbr.rel target = $region3
    $region8: #{tpu_custom_call.1} parent=1 // loop_exit
      _
    %976 = vsyncpa [#allocation3], 1
    %s977 = scalar_lea.sflag [#allocation3], 1
    %978 = vsyncpa %s977, 1

</llo_original>
